<compile_context>
chip_gen: v7x
topology: tpu7x:2x2x1
jax: 0.10.0
libtpu: 0.0.40
codegen_flags: <defaults>
</compile_context>

<pallas_src>
import jax
import jax.numpy as jnp
import numpy as np
from jax.experimental import pallas as pl
from jax.experimental.pallas import tpu as pltpu

LATENT = 128        # latent_size in the PyTorch code
FEATURE_DIM = 64    # config.DATASET.FEATURE_DIM (synthetic, small)
NUM_SEGMENTS = 8    # config.DATASET.NUM_SEGMENTS (synthetic, small)

_IN_PAD = 128                      # padded width of [x | att | 0...] input
_OUT_PAD = 128                     # padded width of the recon block
_OUT_WIDTH = 3 * LATENT + _OUT_PAD  # [means | log_var | z | recon_pad] = 512


def _round_up(n, m):
    return ((n + m - 1) // m) * m


def _cvae_kernel(xa_ref, eps_ref,
                 w_e1_ref, w_e2_ref, w_e3_ref,
                 w_d1_ref, w_d1a_ref, w_d2_ref, w_d3_ref,
                 bias_ref, out_ref):
    xa = xa_ref[...]        # (TM, 128)  = [x | att | zeros]
    eps = eps_ref[...]      # (TM, L)

    b = bias_ref[...]       # (8, 2L) packed biases
    be1 = b[0:1, :LATENT]
    be2 = b[1:2, :LATENT]
    be3 = b[2:3, :]
    bd1 = b[3:4, :LATENT]
    bd2 = b[4:5, :LATENT]
    bd3 = b[5:6, :_OUT_PAD]

    # ---- CEncoder ----  (fc1 on cat([x, att]) folded into the padded K=128 matmul)
    h = jnp.maximum(
        jnp.dot(xa, w_e1_ref[...], preferred_element_type=jnp.float32) + be1, 0.0)
    h = jnp.maximum(
        jnp.dot(h, w_e2_ref[...], preferred_element_type=jnp.float32) + be2, 0.0)
    e = jnp.dot(h, w_e3_ref[...], preferred_element_type=jnp.float32) + be3
    means = e[:, :LATENT]
    log_var = e[:, LATENT:]

    # ---- reparameterization ----
    z = means + eps * jnp.exp(0.5 * log_var)

    # ---- CDecoder ----
    # fc1 on cat([z, att]): the att contribution is a rank-1 matmul on the padded
    # input (only row FEATURE_DIM of w_d1a is non-zero) -> stays on the MXU.
    hd = jnp.maximum(
        jnp.dot(z, w_d1_ref[...], preferred_element_type=jnp.float32)
        + jnp.dot(xa, w_d1a_ref[...], preferred_element_type=jnp.float32)
        + bd1, 0.0)
    hd = jnp.maximum(
        jnp.dot(hd, w_d2_ref[...], preferred_element_type=jnp.float32) + bd2, 0.0)
    recon = jnp.dot(hd, w_d3_ref[...], preferred_element_type=jnp.float32) + bd3

    # Single lane-dense 512-wide output slab -> one unmasked writeback stream.
    out_ref[...] = jnp.concatenate([means, log_var, z, recon], axis=-1)


def _pack_params(params):
    """Repack the per-layer params into lane-/MXU-friendly padded arrays."""
    (we1x, we1a, be1, we2, be2, we3, be3,
     wd1z, wd1a, bd1, wd2, bd2, wd3, bd3) = params
    F, L = FEATURE_DIM, LATENT

    # Encoder fc1: rows 0..F-1 = x weights, row F = att weight row, rest zero.
    w_e1 = jnp.zeros((_IN_PAD, L), jnp.float32)
    w_e1 = w_e1.at[:F].set(we1x).at[F].set(we1a[0])
    # Decoder att rank-1 term expressed as a matmul on the padded input.
    w_d1a = jnp.zeros((_IN_PAD, L), jnp.float32).at[F].set(wd1a[0])
    # Decoder fc3: pad output columns F..127 with zeros (sliced off in wrapper).
    w_d3 = jnp.zeros((L, _OUT_PAD), jnp.float32).at[:, :F].set(wd3)

    # All biases packed into one (8, 2L) array -> single DMA.
    biases = jnp.zeros((8, 2 * L), jnp.float32)
    biases = (biases.at[0, :L].set(be1[0])
                    .at[1, :L].set(be2[0])
                    .at[2, :].set(be3[0])
                    .at[3, :L].set(bd1[0])
                    .at[4, :L].set(bd2[0])
                    .at[5, :F].set(bd3[0]))
    return w_e1, we2, we3, wd1z, w_d1a, wd2, w_d3, biases


def cvae_forward(params, x, att, eps, *, tile_rows=None):
    """x: (B, T, F) f32, att: (B, T) f32, eps: (B, T, L) f32."""
    B, T, F = x.shape
    assert F == FEATURE_DIM and F + 1 <= _IN_PAD
    L = LATENT
    N = B * T

    # Single grid step for small N; 256-row tiles (MXU M dim on v6e/v7x) for big N.
    if tile_rows is None:
        tile_rows = min(_round_up(N, 8), 256)
    tile_rows = _round_up(tile_rows, 8)
    N_pad = _round_up(N, tile_rows)

    # Lane-dense padded input: cols 0..F-1 = x, col F = att, rest zeros.
    xa = jnp.zeros((N_pad, _IN_PAD), jnp.float32)
    xa = xa.at[:N, :F].set(x.reshape(N, F))
    xa = xa.at[:N, F].set(att.reshape(N))
    eps_p = jnp.zeros((N_pad, L), jnp.float32).at[:N].set(eps.reshape(N, L))

    w_e1, w_e2, w_e3, w_d1, w_d1a, w_d2, w_d3, biases = _pack_params(params)

    row_spec = lambda cols: pl.BlockSpec((tile_rows, cols), lambda i: (i, 0))
    w_spec = lambda a: pl.BlockSpec(a.shape, lambda i: (0, 0))   # grid-invariant

    grid = (N_pad // tile_rows,)
    out = pl.pallas_call(
        _cvae_kernel,
        out_shape=jax.ShapeDtypeStruct((N_pad, _OUT_WIDTH), jnp.float32),
        grid_spec=pltpu.PrefetchScalarGridSpec(
            num_scalar_prefetch=0,
            grid=grid,
            in_specs=[
                row_spec(_IN_PAD),          # xa
                row_spec(L),                # eps
                w_spec(w_e1), w_spec(w_e2), w_spec(w_e3),
                w_spec(w_d1), w_spec(w_d1a), w_spec(w_d2), w_spec(w_d3),
                w_spec(biases),
            ],
            out_specs=row_spec(_OUT_WIDTH),
        ),
        compiler_params=pltpu.CompilerParams(
            dimension_semantics=("parallel",)),
    )(xa, eps_p, w_e1, w_e2, w_e3, w_d1, w_d1a, w_d2, w_d3, biases)

    means = out[:N, 0:L].reshape(B, T, L)
    log_var = out[:N, L:2 * L].reshape(B, T, L)
    z = out[:N, 2 * L:3 * L].reshape(B, T, L)
    recon = out[:N, 3 * L:3 * L + F].reshape(B, T, F)
    return means, log_var, z, recon


def _linear_init(key, fan_in, fan_out):
    # PyTorch nn.Linear default: U(-1/sqrt(fan_in), 1/sqrt(fan_in)) for W and b.
    kw, kb = jax.random.split(key)
    bound = 1.0 / np.sqrt(fan_in)
    w = jax.random.uniform(kw, (fan_in, fan_out), jnp.float32, -bound, bound)
    b = jax.random.uniform(kb, (1, fan_out), jnp.float32, -bound, bound)
    return w, b


def init_params(key):
    keys = jax.random.split(key, 6)
    # Encoder: fc1 (F+1 -> L), fc2 (L -> L), fc3 (L -> 2L)
    we1, be1 = _linear_init(keys[0], FEATURE_DIM + 1, LATENT)
    we1x, we1a = we1[:FEATURE_DIM], we1[FEATURE_DIM:FEATURE_DIM + 1]  # (F,L),(1,L)
    we2, be2 = _linear_init(keys[1], LATENT, LATENT)
    we3, be3 = _linear_init(keys[2], LATENT, 2 * LATENT)
    # Decoder: fc1 (L+1 -> L), fc2 (L -> L), fc3 (L -> F)
    wd1, bd1 = _linear_init(keys[3], LATENT + 1, LATENT)
    wd1z, wd1a = wd1[:LATENT], wd1[LATENT:LATENT + 1]                 # (L,L),(1,L)
    wd2, bd2 = _linear_init(keys[4], LATENT, LATENT)
    wd3, bd3 = _linear_init(keys[5], LATENT, FEATURE_DIM)
    return (we1x, we1a, be1, we2, be2, we3, be3,
            wd1z, wd1a, bd1, wd2, bd2, wd3, bd3)


def _reference(params, x, att, eps):
    # Pure-JAX reference of the PyTorch forward, for a silent correctness check.
    (we1x, we1a, be1, we2, be2, we3, be3,
     wd1z, wd1a, bd1, wd2, bd2, wd3, bd3) = params
    B, T, F = x.shape
    a = att.reshape(B, T, 1)
    xa = jnp.concatenate([x, a], axis=-1)
    w1 = jnp.concatenate([we1x, we1a], axis=0)
    h = jax.nn.relu(xa @ w1 + be1)
    h = jax.nn.relu(h @ we2 + be2)
    e = h @ we3 + be3
    means, log_var = e[..., :LATENT], e[..., LATENT:]
    z = means + eps * jnp.exp(0.5 * log_var)
    za = jnp.concatenate([z, a], axis=-1)
    wd1 = jnp.concatenate([wd1z, wd1a], axis=0)
    hd = jax.nn.relu(za @ wd1 + bd1)
    hd = jax.nn.relu(hd @ wd2 + bd2)
    recon = hd @ wd3 + bd3
    return means, log_var, z, recon


if __name__ == "__main__":
    key = jax.random.PRNGKey(0)
    kp, kx, ka, ke = jax.random.split(key, 4)

    B = 4
    params = init_params(kp)
    x = jax.random.normal(kx, (B, NUM_SEGMENTS, FEATURE_DIM), jnp.float32)
    att = jax.random.uniform(ka, (B, NUM_SEGMENTS), jnp.float32)
    eps = jax.random.normal(ke, (B, NUM_SEGMENTS, LATENT), jnp.float32)

    outs = cvae_forward(params, x, att, eps)
    outs = jax.block_until_ready(outs)

    refs = _reference(params, x, att, eps)
    for o, r in zip(outs, refs):
        np.testing.assert_allclose(np.asarray(o), np.asarray(r),
                                   rtol=1e-4, atol=1e-5)

    # TODO(synk): 'inference' mode (z = randn + att) and device-side RNG for eps
    # are driven from the wrapper with jax.random; only 'forward' is fused here.
    print("KERNEL_OK")
</pallas_src>

<mosaic_0001>
module attributes {stable_mosaic.version = 11 : i64} {
  func.func @_cvae_kernel(%arg0: i32, %arg1: memref<32x128xf32, #tpu.memory_space<vmem>>, %arg2: memref<32x128xf32, #tpu.memory_space<vmem>>, %arg3: memref<128x128xf32, #tpu.memory_space<vmem>>, %arg4: memref<128x128xf32, #tpu.memory_space<vmem>>, %arg5: memref<128x256xf32, #tpu.memory_space<vmem>>, %arg6: memref<128x128xf32, #tpu.memory_space<vmem>>, %arg7: memref<128x128xf32, #tpu.memory_space<vmem>>, %arg8: memref<128x128xf32, #tpu.memory_space<vmem>>, %arg9: memref<128x128xf32, #tpu.memory_space<vmem>>, %arg10: memref<8x256xf32, #tpu.memory_space<vmem>>, %arg11: memref<32x512xf32, #tpu.memory_space<vmem>>) attributes {dimension_semantics = [#tpu.dimension_semantics<parallel>], iteration_bounds = array<i64: 1>, scalar_prefetch = 0 : i64, scratch_operands = 0 : i64, tpu.core_type = #tpu.core_type<tc>, window_params = [{transform_indices = @transform_0, window_bounds = array<i64: 32, 128>}, {transform_indices = @transform_1, window_bounds = array<i64: 32, 128>}, {pipeline_mode = #tpu.pipeline_mode<synchronous>, transform_indices = @transform_2, window_bounds = array<i64: 128, 128>}, {pipeline_mode = #tpu.pipeline_mode<synchronous>, transform_indices = @transform_3, window_bounds = array<i64: 128, 128>}, {pipeline_mode = #tpu.pipeline_mode<synchronous>, transform_indices = @transform_4, window_bounds = array<i64: 128, 256>}, {pipeline_mode = #tpu.pipeline_mode<synchronous>, transform_indices = @transform_5, window_bounds = array<i64: 128, 128>}, {pipeline_mode = #tpu.pipeline_mode<synchronous>, transform_indices = @transform_6, window_bounds = array<i64: 128, 128>}, {pipeline_mode = #tpu.pipeline_mode<synchronous>, transform_indices = @transform_7, window_bounds = array<i64: 128, 128>}, {pipeline_mode = #tpu.pipeline_mode<synchronous>, transform_indices = @transform_8, window_bounds = array<i64: 128, 128>}, {pipeline_mode = #tpu.pipeline_mode<synchronous>, transform_indices = @transform_9, window_bounds = array<i64: 8, 256>}, {transform_indices = @transform_10, window_bounds = array<i64: 32, 512>}]} {
    %c0 = arith.constant 0 : index
    %c0_0 = arith.constant 0 : index
    %0 = vector.load %arg1[%c0, %c0_0] : memref<32x128xf32, #tpu.memory_space<vmem>>, vector<32x128xf32>
    %c0_1 = arith.constant 0 : index
    %c0_2 = arith.constant 0 : index
    %1 = vector.load %arg2[%c0_1, %c0_2] : memref<32x128xf32, #tpu.memory_space<vmem>>, vector<32x128xf32>
    %c0_3 = arith.constant 0 : index
    %c0_4 = arith.constant 0 : index
    %2 = vector.load %arg10[%c0_3, %c0_4] : memref<8x256xf32, #tpu.memory_space<vmem>>, vector<8x256xf32>
    %3 = vector.extract_strided_slice %2 {offsets = [0, 0], sizes = [1, 128], strides = [1, 1]} : vector<8x256xf32> to vector<1x128xf32>
    %4 = vector.extract_strided_slice %2 {offsets = [1, 0], sizes = [1, 128], strides = [1, 1]} : vector<8x256xf32> to vector<1x128xf32>
    %5 = vector.extract_strided_slice %2 {offsets = [2, 0], sizes = [1, 256], strides = [1, 1]} : vector<8x256xf32> to vector<1x256xf32>
    %6 = vector.extract_strided_slice %2 {offsets = [3, 0], sizes = [1, 128], strides = [1, 1]} : vector<8x256xf32> to vector<1x128xf32>
    %7 = vector.extract_strided_slice %2 {offsets = [4, 0], sizes = [1, 128], strides = [1, 1]} : vector<8x256xf32> to vector<1x128xf32>
    %8 = vector.extract_strided_slice %2 {offsets = [5, 0], sizes = [1, 128], strides = [1, 1]} : vector<8x256xf32> to vector<1x128xf32>
    %c0_5 = arith.constant 0 : index
    %c0_6 = arith.constant 0 : index
    %9 = vector.load %arg3[%c0_5, %c0_6] : memref<128x128xf32, #tpu.memory_space<vmem>>, vector<128x128xf32>
    %cst = arith.constant dense<0.000000e+00> : vector<32x128xf32>
    %10 = tpu.matmul %0, %9, %cst {dimension_numbers = #tpu.dot_dimension_numbers<[1], [0], [0], [1], [0, 0, 1, 1], [], []>} : vector<32x128xf32>, vector<128x128xf32>, vector<32x128xf32> -> vector<32x128xf32>
    %11 = vector.broadcast %3 : vector<1x128xf32> to vector<32x128xf32>
    %12 = arith.addf %10, %11 : vector<32x128xf32>
    %cst_7 = arith.constant 0.000000e+00 : f32
    %13 = vector.broadcast %cst_7 : f32 to vector<32x128xf32>
    %14 = arith.maximumf %12, %13 : vector<32x128xf32>
    %c0_8 = arith.constant 0 : index
    %c0_9 = arith.constant 0 : index
    %15 = vector.load %arg4[%c0_8, %c0_9] : memref<128x128xf32, #tpu.memory_space<vmem>>, vector<128x128xf32>
    %cst_10 = arith.constant dense<0.000000e+00> : vector<32x128xf32>
    %16 = tpu.matmul %14, %15, %cst_10 {dimension_numbers = #tpu.dot_dimension_numbers<[1], [0], [0], [1], [0, 0, 1, 1], [], []>} : vector<32x128xf32>, vector<128x128xf32>, vector<32x128xf32> -> vector<32x128xf32>
    %17 = vector.broadcast %4 : vector<1x128xf32> to vector<32x128xf32>
    %18 = arith.addf %16, %17 : vector<32x128xf32>
    %cst_11 = arith.constant 0.000000e+00 : f32
    %19 = vector.broadcast %cst_11 : f32 to vector<32x128xf32>
    %20 = arith.maximumf %18, %19 : vector<32x128xf32>
    %c0_12 = arith.constant 0 : index
    %c0_13 = arith.constant 0 : index
    %21 = vector.load %arg5[%c0_12, %c0_13] : memref<128x256xf32, #tpu.memory_space<vmem>>, vector<128x256xf32>
    %cst_14 = arith.constant dense<0.000000e+00> : vector<32x256xf32>
    %22 = tpu.matmul %20, %21, %cst_14 {dimension_numbers = #tpu.dot_dimension_numbers<[1], [0], [0], [1], [0, 0, 1, 1], [], []>} : vector<32x128xf32>, vector<128x256xf32>, vector<32x256xf32> -> vector<32x256xf32>
    %23 = vector.broadcast %5 : vector<1x256xf32> to vector<32x256xf32>
    %24 = arith.addf %22, %23 : vector<32x256xf32>
    %25 = vector.extract_strided_slice %24 {offsets = [0, 0], sizes = [32, 128], strides = [1, 1]} : vector<32x256xf32> to vector<32x128xf32>
    %26 = vector.extract_strided_slice %24 {offsets = [0, 128], sizes = [32, 128], strides = [1, 1]} : vector<32x256xf32> to vector<32x128xf32>
    %cst_15 = arith.constant 5.000000e-01 : f32
    %27 = vector.broadcast %cst_15 : f32 to vector<32x128xf32>
    %28 = arith.mulf %27, %26 : vector<32x128xf32>
    %29 = math.exp %28 : vector<32x128xf32>
    %30 = arith.mulf %1, %29 : vector<32x128xf32>
    %31 = arith.addf %25, %30 : vector<32x128xf32>
    %c0_16 = arith.constant 0 : index
    %c0_17 = arith.constant 0 : index
    %32 = vector.load %arg6[%c0_16, %c0_17] : memref<128x128xf32, #tpu.memory_space<vmem>>, vector<128x128xf32>
    %cst_18 = arith.constant dense<0.000000e+00> : vector<32x128xf32>
    %33 = tpu.matmul %31, %32, %cst_18 {dimension_numbers = #tpu.dot_dimension_numbers<[1], [0], [0], [1], [0, 0, 1, 1], [], []>} : vector<32x128xf32>, vector<128x128xf32>, vector<32x128xf32> -> vector<32x128xf32>
    %c0_19 = arith.constant 0 : index
    %c0_20 = arith.constant 0 : index
    %34 = vector.load %arg7[%c0_19, %c0_20] : memref<128x128xf32, #tpu.memory_space<vmem>>, vector<128x128xf32>
    %cst_21 = arith.constant dense<0.000000e+00> : vector<32x128xf32>
    %35 = tpu.matmul %0, %34, %cst_21 {dimension_numbers = #tpu.dot_dimension_numbers<[1], [0], [0], [1], [0, 0, 1, 1], [], []>} : vector<32x128xf32>, vector<128x128xf32>, vector<32x128xf32> -> vector<32x128xf32>
    %36 = arith.addf %33, %35 : vector<32x128xf32>
    %37 = vector.broadcast %6 : vector<1x128xf32> to vector<32x128xf32>
    %38 = arith.addf %36, %37 : vector<32x128xf32>
    %cst_22 = arith.constant 0.000000e+00 : f32
    %39 = vector.broadcast %cst_22 : f32 to vector<32x128xf32>
    %40 = arith.maximumf %38, %39 : vector<32x128xf32>
    %c0_23 = arith.constant 0 : index
    %c0_24 = arith.constant 0 : index
    %41 = vector.load %arg8[%c0_23, %c0_24] : memref<128x128xf32, #tpu.memory_space<vmem>>, vector<128x128xf32>
    %cst_25 = arith.constant dense<0.000000e+00> : vector<32x128xf32>
    %42 = tpu.matmul %40, %41, %cst_25 {dimension_numbers = #tpu.dot_dimension_numbers<[1], [0], [0], [1], [0, 0, 1, 1], [], []>} : vector<32x128xf32>, vector<128x128xf32>, vector<32x128xf32> -> vector<32x128xf32>
    %43 = vector.broadcast %7 : vector<1x128xf32> to vector<32x128xf32>
    %44 = arith.addf %42, %43 : vector<32x128xf32>
    %cst_26 = arith.constant 0.000000e+00 : f32
    %45 = vector.broadcast %cst_26 : f32 to vector<32x128xf32>
    %46 = arith.maximumf %44, %45 : vector<32x128xf32>
    %c0_27 = arith.constant 0 : index
    %c0_28 = arith.constant 0 : index
    %47 = vector.load %arg9[%c0_27, %c0_28] : memref<128x128xf32, #tpu.memory_space<vmem>>, vector<128x128xf32>
    %cst_29 = arith.constant dense<0.000000e+00> : vector<32x128xf32>
    %48 = tpu.matmul %46, %47, %cst_29 {dimension_numbers = #tpu.dot_dimension_numbers<[1], [0], [0], [1], [0, 0, 1, 1], [], []>} : vector<32x128xf32>, vector<128x128xf32>, vector<32x128xf32> -> vector<32x128xf32>
    %49 = vector.broadcast %8 : vector<1x128xf32> to vector<32x128xf32>
    %50 = arith.addf %48, %49 : vector<32x128xf32>
    %51 = tpu.concatenate %25, %26, %31, %50 in 1 : vector<32x128xf32>, vector<32x128xf32>, vector<32x128xf32>, vector<32x128xf32> -> vector<32x512xf32>
    %c0_30 = arith.constant 0 : index
    %c0_31 = arith.constant 0 : index
    %52 = vector.load %arg11[%c0_30, %c0_31] : memref<32x512xf32, #tpu.memory_space<vmem>>, vector<32x512xf32>
    tpu.vector_store %arg11[%c0_30, %c0_31], %51 {strides = array<i32>} : memref<32x512xf32, #tpu.memory_space<vmem>>, vector<32x512xf32>,
    return
  }
  func.func @transform_0(%arg0: i32) -> (i32, i32) {
    %c0_i32 = arith.constant 0 : i32
    %c0_i32_0 = arith.constant 0 : i32
    return %arg0, %c0_i32 : i32, i32
  }
  func.func @transform_1(%arg0: i32) -> (i32, i32) {
    %c0_i32 = arith.constant 0 : i32
    %c0_i32_0 = arith.constant 0 : i32
    return %arg0, %c0_i32 : i32, i32
  }
  func.func @transform_2(%arg0: i32) -> (i32, i32) {
    %c0_i32 = arith.constant 0 : i32
    %c0_i32_0 = arith.constant 0 : i32
    %c0_i32_1 = arith.constant 0 : i32
    return %c0_i32, %c0_i32_0 : i32, i32
  }
  func.func @transform_3(%arg0: i32) -> (i32, i32) {
    %c0_i32 = arith.constant 0 : i32
    %c0_i32_0 = arith.constant 0 : i32
    %c0_i32_1 = arith.constant 0 : i32
    return %c0_i32, %c0_i32_0 : i32, i32
  }
  func.func @transform_4(%arg0: i32) -> (i32, i32) {
    %c0_i32 = arith.constant 0 : i32
    %c0_i32_0 = arith.constant 0 : i32
    %c0_i32_1 = arith.constant 0 : i32
    return %c0_i32, %c0_i32_0 : i32, i32
  }
  func.func @transform_5(%arg0: i32) -> (i32, i32) {
    %c0_i32 = arith.constant 0 : i32
    %c0_i32_0 = arith.constant 0 : i32
    %c0_i32_1 = arith.constant 0 : i32
    return %c0_i32, %c0_i32_0 : i32, i32
  }
  func.func @transform_6(%arg0: i32) -> (i32, i32) {
    %c0_i32 = arith.constant 0 : i32
    %c0_i32_0 = arith.constant 0 : i32
    %c0_i32_1 = arith.constant 0 : i32
    return %c0_i32, %c0_i32_0 : i32, i32
  }
  func.func @transform_7(%arg0: i32) -> (i32, i32) {
    %c0_i32 = arith.constant 0 : i32
    %c0_i32_0 = arith.constant 0 : i32
    %c0_i32_1 = arith.constant 0 : i32
    return %c0_i32, %c0_i32_0 : i32, i32
  }
  func.func @transform_8(%arg0: i32) -> (i32, i32) {
    %c0_i32 = arith.constant 0 : i32
    %c0_i32_0 = arith.constant 0 : i32
    %c0_i32_1 = arith.constant 0 : i32
    return %c0_i32, %c0_i32_0 : i32, i32
  }
  func.func @transform_9(%arg0: i32) -> (i32, i32) {
    %c0_i32 = arith.constant 0 : i32
    %c0_i32_0 = arith.constant 0 : i32
    %c0_i32_1 = arith.constant 0 : i32
    return %c0_i32, %c0_i32_0 : i32, i32
  }
  func.func @transform_10(%arg0: i32) -> (i32, i32) {
    %c0_i32 = arith.constant 0 : i32
    %c0_i32_0 = arith.constant 0 : i32
    return %arg0, %c0_i32 : i32, i32
  }
}

</mosaic_0001>

<llo_original>
// kernel: tpu_custom_call.1
$region0: #{tpu_custom_call.1}
  #allocation0 [shape = 'u32[]', space=smem, size = 0x4, offset = 0x4, fixed_abs, tag = 'smem constant byte address 0x4 - core index']
  #allocation1 [shape = 'u32[144,128]{1,0:T(1,128)}', space=vmem, size = 0x12000, scoped, tag = 'internal scratch']
  %s0 = inlined_call_operand.hbm [shape: f32[32,128], index: 0, kind: input, shape index: {}]
  %s1 = inlined_call_operand.hbm [shape: f32[32,128], index: 1, kind: input, shape index: {}]
  %s2 = inlined_call_operand.hbm [shape: f32[128,128], index: 2, kind: input, shape index: {}]
  %s3 = inlined_call_operand.hbm [shape: f32[128,128], index: 3, kind: input, shape index: {}]
  %s4 = inlined_call_operand.hbm [shape: f32[128,256], index: 4, kind: input, shape index: {}]
  %s5 = inlined_call_operand.hbm [shape: f32[128,128], index: 5, kind: input, shape index: {}]
  %s6 = inlined_call_operand.hbm [shape: f32[128,128], index: 6, kind: input, shape index: {}]
  %s7 = inlined_call_operand.hbm [shape: f32[128,128], index: 7, kind: input, shape index: {}]
  %s8 = inlined_call_operand.hbm [shape: f32[128,128], index: 8, kind: input, shape index: {}]
  %s9 = inlined_call_operand.vmem [shape: f32[8,256], index: 9, kind: input, shape index: {}]
  %s10 = inlined_call_operand.hbm [shape: f32[32,512], index: 10, kind: output, shape index: {}]
  %s11 = sld [smem:[#allocation0]]
  $region86: #{tpu_custom_call.1} parent=0
    _
  %s13 = ssub.s32 1, %s11
  %s14 = scalar_select 0, %s13, %s11
  $region1: #{tpu_custom_call.1} parent=0
    #allocation2 [shape = 'u8[16384]{0}', space=vmem, size = 0x4000, scoped, tag = 'input window, operand 0, single buffered']
    #allocation3 [shape = 's32[1]{0}', space=sflag, size = 0x4, scoped, tag = 'scoped memory for tpu_custom_call.1']
    #allocation4 [shape = 's32[1]{0}', space=sflag, size = 0x4, scoped, tag = 'scoped memory for tpu_custom_call.1']
    #allocation5 [shape = 'u8[16384]{0}', space=vmem, size = 0x4000, scoped, tag = 'input window, operand 1, single buffered']
    #allocation6 [shape = 's32[1]{0}', space=sflag, size = 0x4, scoped, tag = 'scoped memory for tpu_custom_call.1']
    #allocation7 [shape = 'u8[65536]{0}', space=vmem, size = 0x10000, scoped, tag = 'input window, operand 2, single buffered']
    #allocation8 [shape = 'u8[65536]{0}', space=vmem, size = 0x10000, scoped, tag = 'input window, operand 3, single buffered']
    #allocation9 [shape = 's32[1]{0}', space=sflag, size = 0x4, scoped, tag = 'scoped memory for tpu_custom_call.1']
    #allocation10 [shape = 'u8[131072]{0}', space=vmem, size = 0x20000, scoped, tag = 'input window, operand 4, single buffered']
    #allocation11 [shape = 'u8[65536]{0}', space=vmem, size = 0x10000, scoped, tag = 'input window, operand 5, single buffered']
    #allocation12 [shape = 's32[1]{0}', space=sflag, size = 0x4, scoped, tag = 'scoped memory for tpu_custom_call.1']
    #allocation13 [shape = 'u8[65536]{0}', space=vmem, size = 0x10000, scoped, tag = 'input window, operand 6, single buffered']
    #allocation14 [shape = 'u8[65536]{0}', space=vmem, size = 0x10000, scoped, tag = 'input window, operand 7, single buffered']
    #allocation15 [shape = 's32[1]{0}', space=sflag, size = 0x4, scoped, tag = 'scoped memory for tpu_custom_call.1']
    #allocation16 [shape = 'u8[65536]{0}', space=vmem, size = 0x10000, scoped, tag = 'input window, operand 8, single buffered']
    #allocation17 [shape = 'u8[65536]{0}', space=vmem, size = 0x10000, scoped, tag = 'output window, operand 0, single buffered']
    %15 = vsyncpa [#allocation3], 0
    %16 = vsyncpa [#allocation6], 0
    %17 = vsyncpa [#allocation9], 0
    %18 = vsyncpa [#allocation12], 0
    %19 = vsyncpa [#allocation15], 0
    %20 = vsyncpa [#allocation4], 0
    // Predicated region
    $region2: #{tpu_custom_call.1} parent=1 // pred_check
      _
    $region3: #{tpu_custom_call.1} parent=1 // pred_check_branch
      %22 = sbr.rel (0) target = $region5
    $region4: #{tpu_custom_call.1} parent=1 // pred_region
      %s24 = ssub.s32 512, 512
      %25 = vsyncadd [#allocation3], %s24
      %s26 = sshll.u32 [#allocation2], 4
      %s27 = int_to_ptr.vmem [resolvable:$true] %s26
      %32 = dma.hbm_to_vmem [thread:$0]  %s0, 512, %s27, [#allocation3], 128, 128, 8
    $region5: #{tpu_custom_call.1} parent=1 // pred_fallthru
      _
    // Predicated region
    $region6: #{tpu_custom_call.1} parent=1 // pred_check
      _
    $region7: #{tpu_custom_call.1} parent=1 // pred_check_branch
      %34 = sbr.rel (0) target = $region9
    $region8: #{tpu_custom_call.1} parent=1 // pred_region
      %s36 = ssub.s32 512, 512
      %37 = vsyncadd [#allocation6], %s36
      %s38 = sshll.u32 [#allocation5], 4
      %s39 = int_to_ptr.vmem [resolvable:$true] %s38
      %44 = dma.hbm_to_vmem [thread:$0]  %s1, 512, %s39, [#allocation6], 128, 128, 8
    $region9: #{tpu_custom_call.1} parent=1 // pred_fallthru
      _
    // Predicated region
    $region10: #{tpu_custom_call.1} parent=1 // pred_check
      _
    $region11: #{tpu_custom_call.1} parent=1 // pred_check_branch
      %46 = sbr.rel (0) target = $region13
    $region12: #{tpu_custom_call.1} parent=1 // pred_region
      %s48 = ssub.s32 2048, 2048
      %49 = vsyncadd [#allocation6], %s48
      %s50 = sshll.u32 [#allocation7], 4
      %s51 = int_to_ptr.vmem [resolvable:$true] %s50
      %56 = dma.hbm_to_vmem [thread:$0]  %s2, 2048, %s51, [#allocation6], 128, 128, 8
    $region13: #{tpu_custom_call.1} parent=1 // pred_fallthru
      _
    // Predicated region
    $region14: #{tpu_custom_call.1} parent=1 // pred_check
      _
    $region15: #{tpu_custom_call.1} parent=1 // pred_check_branch
      %58 = sbr.rel (0) target = $region17
    $region16: #{tpu_custom_call.1} parent=1 // pred_region
      %s60 = ssub.s32 2048, 2048
      %61 = vsyncadd [#allocation9], %s60
      %s62 = sshll.u32 [#allocation8], 4
      %s63 = int_to_ptr.vmem [resolvable:$true] %s62
      %68 = dma.hbm_to_vmem [thread:$0]  %s3, 2048, %s63, [#allocation9], 128, 128, 8
    $region17: #{tpu_custom_call.1} parent=1 // pred_fallthru
      _
    // Predicated region
    $region18: #{tpu_custom_call.1} parent=1 // pred_check
      _
    $region19: #{tpu_custom_call.1} parent=1 // pred_check_branch
      %70 = sbr.rel (0) target = $region21
    $region20: #{tpu_custom_call.1} parent=1 // pred_region
      %s72 = ssub.s32 4096, 4096
      %73 = vsyncadd [#allocation9], %s72
      %s74 = sshll.u32 [#allocation10], 4
      %s75 = int_to_ptr.vmem [resolvable:$true] %s74
      %80 = dma.hbm_to_vmem [thread:$0]  %s4, 4096, %s75, [#allocation9], 256, 256, 16
    $region21: #{tpu_custom_call.1} parent=1 // pred_fallthru
      _
    // Predicated region
    $region22: #{tpu_custom_call.1} parent=1 // pred_check
      _
    $region23: #{tpu_custom_call.1} parent=1 // pred_check_branch
      %82 = sbr.rel (0) target = $region25
    $region24: #{tpu_custom_call.1} parent=1 // pred_region
      %s84 = ssub.s32 2048, 2048
      %85 = vsyncadd [#allocation12], %s84
      %s86 = sshll.u32 [#allocation11], 4
      %s87 = int_to_ptr.vmem [resolvable:$true] %s86
      %92 = dma.hbm_to_vmem [thread:$0]  %s5, 2048, %s87, [#allocation12], 128, 128, 8
    $region25: #{tpu_custom_call.1} parent=1 // pred_fallthru
      _
    // Predicated region
    $region26: #{tpu_custom_call.1} parent=1 // pred_check
      _
    $region27: #{tpu_custom_call.1} parent=1 // pred_check_branch
      %94 = sbr.rel (0) target = $region29
    $region28: #{tpu_custom_call.1} parent=1 // pred_region
      %s96 = ssub.s32 2048, 2048
      %97 = vsyncadd [#allocation12], %s96
      %s98 = sshll.u32 [#allocation13], 4
      %s99 = int_to_ptr.vmem [resolvable:$true] %s98
      %104 = dma.hbm_to_vmem [thread:$0]  %s6, 2048, %s99, [#allocation12], 128, 128, 8
    $region29: #{tpu_custom_call.1} parent=1 // pred_fallthru
      _
    // Predicated region
    $region30: #{tpu_custom_call.1} parent=1 // pred_check
      _
    $region31: #{tpu_custom_call.1} parent=1 // pred_check_branch
      %106 = sbr.rel (0) target = $region33
    $region32: #{tpu_custom_call.1} parent=1 // pred_region
      %s108 = ssub.s32 2048, 2048
      %109 = vsyncadd [#allocation15], %s108
      %s110 = sshll.u32 [#allocation14], 4
      %s111 = int_to_ptr.vmem [resolvable:$true] %s110
      %116 = dma.hbm_to_vmem [thread:$0]  %s7, 2048, %s111, [#allocation15], 128, 128, 8
    $region33: #{tpu_custom_call.1} parent=1 // pred_fallthru
      _
    // Predicated region
    $region34: #{tpu_custom_call.1} parent=1 // pred_check
      _
    $region35: #{tpu_custom_call.1} parent=1 // pred_check_branch
      %118 = sbr.rel (0) target = $region37
    $region36: #{tpu_custom_call.1} parent=1 // pred_region
      %s120 = ssub.s32 2048, 2048
      %121 = vsyncadd [#allocation15], %s120
      %s122 = sshll.u32 [#allocation16], 4
      %s123 = int_to_ptr.vmem [resolvable:$true] %s122
      %128 = dma.hbm_to_vmem [thread:$0]  %s8, 2048, %s123, [#allocation15], 128, 128, 8
    $region37: #{tpu_custom_call.1} parent=1 // pred_fallthru
      _
    // Predicated region
    $region38: #{tpu_custom_call.1} parent=1 // pred_check
      _
    $region39: #{tpu_custom_call.1} parent=1 // pred_check_branch
      %130 = sbr.rel (0) target = $region41
    $region40: #{tpu_custom_call.1} parent=1 // pred_region
      _
    $region41: #{tpu_custom_call.1} parent=1 // pred_fallthru
      _
    // Predicated region
    $region42: #{tpu_custom_call.1} parent=1 // pred_check
      _
    $region43: #{tpu_custom_call.1} parent=1 // pred_check_branch
      %132 = sbr.rel (0) target = $region45
    $region44: #{tpu_custom_call.1} parent=1 // pred_region
      %133 = dma.done [#allocation3], 512
    $region45: #{tpu_custom_call.1} parent=1 // pred_fallthru
      _
    // Predicated region
    $region46: #{tpu_custom_call.1} parent=1 // pred_check
      _
    $region47: #{tpu_custom_call.1} parent=1 // pred_check_branch
      %135 = sbr.rel (0) target = $region49
    $region48: #{tpu_custom_call.1} parent=1 // pred_region
      %136 = dma.done [#allocation6], 512
    $region49: #{tpu_custom_call.1} parent=1 // pred_fallthru
      _
    // Predicated region
    $region50: #{tpu_custom_call.1} parent=1 // pred_check
      _
    $region51: #{tpu_custom_call.1} parent=1 // pred_check_branch
      %138 = sbr.rel (0) target = $region53
    $region52: #{tpu_custom_call.1} parent=1 // pred_region
      %139 = dma.done [#allocation6], 2048
    $region53: #{tpu_custom_call.1} parent=1 // pred_fallthru
      _
    // Predicated region
    $region54: #{tpu_custom_call.1} parent=1 // pred_check
      _
    $region55: #{tpu_custom_call.1} parent=1 // pred_check_branch
      %141 = sbr.rel (0) target = $region57
    $region56: #{tpu_custom_call.1} parent=1 // pred_region
      %142 = dma.done [#allocation9], 2048
    $region57: #{tpu_custom_call.1} parent=1 // pred_fallthru
      _
    // Predicated region
    $region58: #{tpu_custom_call.1} parent=1 // pred_check
      _
    $region59: #{tpu_custom_call.1} parent=1 // pred_check_branch
      %144 = sbr.rel (0) target = $region61
    $region60: #{tpu_custom_call.1} parent=1 // pred_region
      %145 = dma.done [#allocation9], 4096
    $region61: #{tpu_custom_call.1} parent=1 // pred_fallthru
      _
    // Predicated region
    $region62: #{tpu_custom_call.1} parent=1 // pred_check
      _
    $region63: #{tpu_custom_call.1} parent=1 // pred_check_branch
      %147 = sbr.rel (0) target = $region65
    $region64: #{tpu_custom_call.1} parent=1 // pred_region
      %148 = dma.done [#allocation12], 2048
    $region65: #{tpu_custom_call.1} parent=1 // pred_fallthru
      _
    // Predicated region
    $region66: #{tpu_custom_call.1} parent=1 // pred_check
      _
    $region67: #{tpu_custom_call.1} parent=1 // pred_check_branch
      %150 = sbr.rel (0) target = $region69
    $region68: #{tpu_custom_call.1} parent=1 // pred_region
      %151 = dma.done [#allocation12], 2048
    $region69: #{tpu_custom_call.1} parent=1 // pred_fallthru
      _
    // Predicated region
    $region70: #{tpu_custom_call.1} parent=1 // pred_check
      _
    $region71: #{tpu_custom_call.1} parent=1 // pred_check_branch
      %153 = sbr.rel (0) target = $region73
    $region72: #{tpu_custom_call.1} parent=1 // pred_region
      %154 = dma.done [#allocation15], 2048
    $region73: #{tpu_custom_call.1} parent=1 // pred_fallthru
      _
    // Predicated region
    $region74: #{tpu_custom_call.1} parent=1 // pred_check
      _
    $region75: #{tpu_custom_call.1} parent=1 // pred_check_branch
      %156 = sbr.rel (0) target = $region77
    $region76: #{tpu_custom_call.1} parent=1 // pred_region
      %157 = dma.done [#allocation15], 2048
    $region77: #{tpu_custom_call.1} parent=1 // pred_fallthru
      _
    %v158 = vld [vmem:[#allocation2] sm:$0xff]
    %v159 = vld [vmem:[#allocation2 + $0x8] sm:$0xff]
    %v160 = vld [vmem:[#allocation2 + $0x10] sm:$0xff]
    %v161 = vld [vmem:[#allocation2 + $0x18] sm:$0xff]
    %v162 = vld [vmem:[#allocation5] sm:$0xff]
    %v163 = vld [vmem:[#allocation5 + $0x8] sm:$0xff]
    %v164 = vld [vmem:[#allocation5 + $0x10] sm:$0xff]
    %v165 = vld [vmem:[#allocation5 + $0x18] sm:$0xff]
    %v166 = vld [vmem:[%s9] sm:$0xff]
    %v167 = vld [vmem:[%s9 + $0x8] sm:$0xff]
    %v168 = vld [vmem:[#allocation7] sm:$0xff]
    %v169 = vld [vmem:[#allocation7 + $0x8] sm:$0xff]
    %v170 = vld [vmem:[#allocation7 + $0x10] sm:$0xff]
    %v171 = vld [vmem:[#allocation7 + $0x18] sm:$0xff]
    %v172 = vld [vmem:[#allocation7 + $0x20] sm:$0xff]
    %v173 = vld [vmem:[#allocation7 + $0x28] sm:$0xff]
    %v174 = vld [vmem:[#allocation7 + $0x30] sm:$0xff]
    %v175 = vld [vmem:[#allocation7 + $0x38] sm:$0xff]
    %v176 = vld [vmem:[#allocation7 + $0x40] sm:$0xff]
    %v177 = vld [vmem:[#allocation7 + $0x48] sm:$0xff]
    %v178 = vld [vmem:[#allocation7 + $0x50] sm:$0xff]
    %v179 = vld [vmem:[#allocation7 + $0x58] sm:$0xff]
    %v180 = vld [vmem:[#allocation7 + $0x60] sm:$0xff]
    %v181 = vld [vmem:[#allocation7 + $0x68] sm:$0xff]
    %v182 = vld [vmem:[#allocation7 + $0x70] sm:$0xff]
    %v183 = vld [vmem:[#allocation7 + $0x78] sm:$0xff]
    %v184 = vlaneseq
    %v185 = vshrl.u32 %v184, 7
    %v186 = vsub.s32 0, %v185
    %v187 = vrot.slane %v166, %v186
    %188 = vmatprep.subr.mxu0 0.0
    %189 = vmatpush1.msra.mxu0 %v168
    %190 = vmatprep.subr.mxu0 0.0
    %191 = vmatpush1.msra.mxu0 %v169
    %192 = vmatprep.subr.mxu0 0.0
    %193 = vmatpush1.msra.mxu0 %v170
    %194 = vmatprep.subr.mxu0 0.0
    %195 = vmatpush1.msra.mxu0 %v171
    %196 = vmatprep.subr.mxu0 0.0
    %197 = vmatpush1.msra.mxu0 %v172
    %198 = vmatprep.subr.mxu0 0.0
    %199 = vmatpush1.msra.mxu0 %v173
    %200 = vmatprep.subr.mxu0 0.0
    %201 = vmatpush1.msra.mxu0 %v174
    %202 = vmatprep.subr.mxu0 0.0
    %203 = vmatpush1.msra.mxu0 %v175
    %204 = vmatprep.subr.mxu0 0.0
    %205 = vmatpush1.msra.mxu0 %v176
    %206 = vmatprep.subr.mxu0 0.0
    %207 = vmatpush1.msra.mxu0 %v177
    %208 = vmatprep.subr.mxu0 0.0
    %209 = vmatpush1.msra.mxu0 %v178
    %210 = vmatprep.subr.mxu0 0.0
    %211 = vmatpush1.msra.mxu0 %v179
    %212 = vmatprep.subr.mxu0 0.0
    %213 = vmatpush1.msra.mxu0 %v180
    %214 = vmatprep.subr.mxu0 0.0
    %215 = vmatpush1.msra.mxu0 %v181
    %216 = vmatprep.subr.mxu0 0.0
    %217 = vmatpush1.msra.mxu0 %v182
    %218 = vmatprep.subr.mxu0 0.0
    %219 = vmatpush1.msra.mxu0 %v183
    %220 = vmatprep.subr.mxu0 0.0
    %221 = vmatpush1.msra.mxu0 0.0
    %222 = vmatprep.subr.mxu0 0.0
    %223 = vmatpush1.msra.mxu0 0.0
    %224 = vmatprep.subr.mxu0 0.0
    %225 = vmatpush1.msra.mxu0 0.0
    %226 = vmatprep.subr.mxu0 0.0
    %227 = vmatpush1.msra.mxu0 0.0
    %228 = vmatprep.subr.mxu0 0.0
    %229 = vmatpush1.msra.mxu0 0.0
    %230 = vmatprep.subr.mxu0 0.0
    %231 = vmatpush1.msra.mxu0 0.0
    %232 = vmatprep.subr.mxu0 0.0
    %233 = vmatpush1.msra.mxu0 0.0
    %234 = vmatprep.subr.mxu0 0.0
    %235 = vmatpush1.msra.mxu0 0.0
    %236 = vmatprep.subr.mxu0 0.0
    %237 = vmatpush1.msra.mxu0 0.0
    %238 = vmatprep.subr.mxu0 0.0
    %239 = vmatpush1.msra.mxu0 0.0
    %240 = vmatprep.subr.mxu0 0.0
    %241 = vmatpush1.msra.mxu0 0.0
    %242 = vmatprep.subr.mxu0 0.0
    %243 = vmatpush1.msra.mxu0 0.0
    %244 = vmatprep.subr.mxu0 0.0
    %245 = vmatpush1.msra.mxu0 0.0
    %246 = vmatprep.subr.mxu0 0.0
    %247 = vmatpush1.msra.mxu0 0.0
    %248 = vmatprep.subr.mxu0 0.0
    %249 = vmatpush1.msra.mxu0 0.0
    %250 = vmatprep.subr.mxu0 0.0
    %251 = vmatpush1.msra.mxu0 0.0
    %252 = vmatprep.mubr.f32.mxu0 0.0
    %253 = vmatmul.mubr.f32.gmra.mrb[0].mxu0 %v158
    %v254 = vpop.f32.mrb[0].mxu0
    %v255 = vadd.f32 %v187, %v254
    %v256 = vpop.f32.mrb[0].mxu0
    %257 = vmatprep.mubr.f32.mxu0 0.0
    %258 = vmatmul.mubr.f32.gmra.mrb[0].mxu0 %v159
    %v259 = vpop.f32.mrb[0].mxu0
    %v260 = vadd.f32 %v187, %v259
    %v261 = vpop.f32.mrb[0].mxu0
    %262 = vmatprep.mubr.f32.mxu0 0.0
    %263 = vmatmul.mubr.f32.gmra.mrb[0].mxu0 %v160
    %v264 = vpop.f32.mrb[0].mxu0
    %v265 = vadd.f32 %v187, %v264
    %v266 = vpop.f32.mrb[0].mxu0
    %267 = vmatprep.mubr.f32.mxu0 0.0
    %268 = vmatmul.mubr.f32.gmra.mrb[0].mxu0 %v161
    %v269 = vpop.f32.mrb[0].mxu0
    %v270 = vadd.f32 %v187, %v269
    %v271 = vpop.f32.mrb[0].mxu0
    %272 = vdwg.mxu0
    %v273 = vmax.f32 %v255, 0.0
    %v274 = vmax.f32 %v260, 0.0
    %v275 = vmax.f32 %v265, 0.0
    %v276 = vmax.f32 %v270, 0.0
    %v277 = vld [vmem:[#allocation8] sm:$0xff]
    %v278 = vld [vmem:[#allocation8 + $0x8] sm:$0xff]
    %v279 = vld [vmem:[#allocation8 + $0x10] sm:$0xff]
    %v280 = vld [vmem:[#allocation8 + $0x18] sm:$0xff]
    %v281 = vld [vmem:[#allocation8 + $0x20] sm:$0xff]
    %v282 = vld [vmem:[#allocation8 + $0x28] sm:$0xff]
    %v283 = vld [vmem:[#allocation8 + $0x30] sm:$0xff]
    %v284 = vld [vmem:[#allocation8 + $0x38] sm:$0xff]
    %v285 = vld [vmem:[#allocation8 + $0x40] sm:$0xff]
    %v286 = vld [vmem:[#allocation8 + $0x48] sm:$0xff]
    %v287 = vld [vmem:[#allocation8 + $0x50] sm:$0xff]
    %v288 = vld [vmem:[#allocation8 + $0x58] sm:$0xff]
    %v289 = vld [vmem:[#allocation8 + $0x60] sm:$0xff]
    %v290 = vld [vmem:[#allocation8 + $0x68] sm:$0xff]
    %v291 = vld [vmem:[#allocation8 + $0x70] sm:$0xff]
    %v292 = vld [vmem:[#allocation8 + $0x78] sm:$0xff]
    %v293 = vlaneseq
    %v294 = vshrl.u32 %v293, 7
    %v295 = vsub.s32 1, %v294
    %v296 = vrot.slane %v166, %v295
    %297 = vmatprep.subr.mxu0 0.0
    %298 = vmatpush1.msra.mxu0 %v277
    %299 = vmatprep.subr.mxu0 0.0
    %300 = vmatpush1.msra.mxu0 %v278
    %301 = vmatprep.subr.mxu0 0.0
    %302 = vmatpush1.msra.mxu0 %v279
    %303 = vmatprep.subr.mxu0 0.0
    %304 = vmatpush1.msra.mxu0 %v280
    %305 = vmatprep.subr.mxu0 0.0
    %306 = vmatpush1.msra.mxu0 %v281
    %307 = vmatprep.subr.mxu0 0.0
    %308 = vmatpush1.msra.mxu0 %v282
    %309 = vmatprep.subr.mxu0 0.0
    %310 = vmatpush1.msra.mxu0 %v283
    %311 = vmatprep.subr.mxu0 0.0
    %312 = vmatpush1.msra.mxu0 %v284
    %313 = vmatprep.subr.mxu0 0.0
    %314 = vmatpush1.msra.mxu0 %v285
    %315 = vmatprep.subr.mxu0 0.0
    %316 = vmatpush1.msra.mxu0 %v286
    %317 = vmatprep.subr.mxu0 0.0
    %318 = vmatpush1.msra.mxu0 %v287
    %319 = vmatprep.subr.mxu0 0.0
    %320 = vmatpush1.msra.mxu0 %v288
    %321 = vmatprep.subr.mxu0 0.0
    %322 = vmatpush1.msra.mxu0 %v289
    %323 = vmatprep.subr.mxu0 0.0
    %324 = vmatpush1.msra.mxu0 %v290
    %325 = vmatprep.subr.mxu0 0.0
    %326 = vmatpush1.msra.mxu0 %v291
    %327 = vmatprep.subr.mxu0 0.0
    %328 = vmatpush1.msra.mxu0 %v292
    %329 = vmatprep.subr.mxu0 0.0
    %330 = vmatpush1.msra.mxu0 0.0
    %331 = vmatprep.subr.mxu0 0.0
    %332 = vmatpush1.msra.mxu0 0.0
    %333 = vmatprep.subr.mxu0 0.0
    %334 = vmatpush1.msra.mxu0 0.0
    %335 = vmatprep.subr.mxu0 0.0
    %336 = vmatpush1.msra.mxu0 0.0
    %337 = vmatprep.subr.mxu0 0.0
    %338 = vmatpush1.msra.mxu0 0.0
    %339 = vmatprep.subr.mxu0 0.0
    %340 = vmatpush1.msra.mxu0 0.0
    %341 = vmatprep.subr.mxu0 0.0
    %342 = vmatpush1.msra.mxu0 0.0
    %343 = vmatprep.subr.mxu0 0.0
    %344 = vmatpush1.msra.mxu0 0.0
    %345 = vmatprep.subr.mxu0 0.0
    %346 = vmatpush1.msra.mxu0 0.0
    %347 = vmatprep.subr.mxu0 0.0
    %348 = vmatpush1.msra.mxu0 0.0
    %349 = vmatprep.subr.mxu0 0.0
    %350 = vmatpush1.msra.mxu0 0.0
    %351 = vmatprep.subr.mxu0 0.0
    %352 = vmatpush1.msra.mxu0 0.0
    %353 = vmatprep.subr.mxu0 0.0
    %354 = vmatpush1.msra.mxu0 0.0
    %355 = vmatprep.subr.mxu0 0.0
    %356 = vmatpush1.msra.mxu0 0.0
    %357 = vmatprep.subr.mxu0 0.0
    %358 = vmatpush1.msra.mxu0 0.0
    %359 = vmatprep.subr.mxu0 0.0
    %360 = vmatpush1.msra.mxu0 0.0
    %361 = vmatprep.mubr.f32.mxu0 0.0
    %362 = vmatmul.mubr.f32.gmra.mrb[0].mxu0 %v273
    %v363 = vpop.f32.mrb[0].mxu0
    %v364 = vadd.f32 %v296, %v363
    %v365 = vpop.f32.mrb[0].mxu0
    %366 = vmatprep.mubr.f32.mxu0 0.0
    %367 = vmatmul.mubr.f32.gmra.mrb[0].mxu0 %v274
    %v368 = vpop.f32.mrb[0].mxu0
    %v369 = vadd.f32 %v296, %v368
    %v370 = vpop.f32.mrb[0].mxu0
    %371 = vmatprep.mubr.f32.mxu0 0.0
    %372 = vmatmul.mubr.f32.gmra.mrb[0].mxu0 %v275
    %v373 = vpop.f32.mrb[0].mxu0
    %v374 = vadd.f32 %v296, %v373
    %v375 = vpop.f32.mrb[0].mxu0
    %376 = vmatprep.mubr.f32.mxu0 0.0
    %377 = vmatmul.mubr.f32.gmra.mrb[0].mxu0 %v276
    %v378 = vpop.f32.mrb[0].mxu0
    %v379 = vadd.f32 %v296, %v378
    %v380 = vpop.f32.mrb[0].mxu0
    %381 = vdwg.mxu0
    %v382 = vmax.f32 %v364, 0.0
    %v383 = vmax.f32 %v369, 0.0
    %v384 = vmax.f32 %v374, 0.0
    %v385 = vmax.f32 %v379, 0.0
    %v386 = vld [vmem:[#allocation10] sm:$0xff]
    %v387 = vld [vmem:[#allocation10 + $0x8] sm:$0xff]
    %v388 = vld [vmem:[#allocation10 + $0x10] sm:$0xff]
    %v389 = vld [vmem:[#allocation10 + $0x18] sm:$0xff]
    %v390 = vld [vmem:[#allocation10 + $0x20] sm:$0xff]
    %v391 = vld [vmem:[#allocation10 + $0x28] sm:$0xff]
    %v392 = vld [vmem:[#allocation10 + $0x30] sm:$0xff]
    %v393 = vld [vmem:[#allocation10 + $0x38] sm:$0xff]
    %v394 = vld [vmem:[#allocation10 + $0x40] sm:$0xff]
    %v395 = vld [vmem:[#allocation10 + $0x48] sm:$0xff]
    %v396 = vld [vmem:[#allocation10 + $0x50] sm:$0xff]
    %v397 = vld [vmem:[#allocation10 + $0x58] sm:$0xff]
    %v398 = vld [vmem:[#allocation10 + $0x60] sm:$0xff]
    %v399 = vld [vmem:[#allocation10 + $0x68] sm:$0xff]
    %v400 = vld [vmem:[#allocation10 + $0x70] sm:$0xff]
    %v401 = vld [vmem:[#allocation10 + $0x78] sm:$0xff]
    %v402 = vld [vmem:[#allocation10 + $0x80] sm:$0xff]
    %v403 = vld [vmem:[#allocation10 + $0x88] sm:$0xff]
    %v404 = vld [vmem:[#allocation10 + $0x90] sm:$0xff]
    %v405 = vld [vmem:[#allocation10 + $0x98] sm:$0xff]
    %v406 = vld [vmem:[#allocation10 + $0xa0] sm:$0xff]
    %v407 = vld [vmem:[#allocation10 + $0xa8] sm:$0xff]
    %v408 = vld [vmem:[#allocation10 + $0xb0] sm:$0xff]
    %v409 = vld [vmem:[#allocation10 + $0xb8] sm:$0xff]
    %v410 = vld [vmem:[#allocation10 + $0xc0] sm:$0xff]
    %v411 = vld [vmem:[#allocation10 + $0xc8] sm:$0xff]
    %v412 = vld [vmem:[#allocation10 + $0xd0] sm:$0xff]
    %v413 = vld [vmem:[#allocation10 + $0xd8] sm:$0xff]
    %v414 = vld [vmem:[#allocation10 + $0xe0] sm:$0xff]
    %v415 = vld [vmem:[#allocation10 + $0xe8] sm:$0xff]
    %v416 = vld [vmem:[#allocation10 + $0xf0] sm:$0xff]
    %v417 = vld [vmem:[#allocation10 + $0xf8] sm:$0xff]
    %v418 = vlaneseq
    %v419 = vshrl.u32 %v418, 7
    %v420 = vsub.s32 2, %v419
    %v421 = vrot.slane %v166, %v420
    %v422 = vlaneseq
    %v423 = vshrl.u32 %v422, 7
    %v424 = vsub.s32 2, %v423
    %v425 = vrot.slane %v167, %v424
    %426 = vmatprep.subr.mxu0 %v387
    %427 = vmatpush1.msra.mxu0 %v386
    %428 = vmatprep.subr.mxu0 %v389
    %429 = vmatpush1.msra.mxu0 %v388
    %430 = vmatprep.subr.mxu0 %v391
    %431 = vmatpush1.msra.mxu0 %v390
    %432 = vmatprep.subr.mxu0 %v393
    %433 = vmatpush1.msra.mxu0 %v392
    %434 = vmatprep.subr.mxu0 %v395
    %435 = vmatpush1.msra.mxu0 %v394
    %436 = vmatprep.subr.mxu0 %v397
    %437 = vmatpush1.msra.mxu0 %v396
    %438 = vmatprep.subr.mxu0 %v399
    %439 = vmatpush1.msra.mxu0 %v398
    %440 = vmatprep.subr.mxu0 %v401
    %441 = vmatpush1.msra.mxu0 %v400
    %442 = vmatprep.subr.mxu0 %v403
    %443 = vmatpush1.msra.mxu0 %v402
    %444 = vmatprep.subr.mxu0 %v405
    %445 = vmatpush1.msra.mxu0 %v404
    %446 = vmatprep.subr.mxu0 %v407
    %447 = vmatpush1.msra.mxu0 %v406
    %448 = vmatprep.subr.mxu0 %v409
    %449 = vmatpush1.msra.mxu0 %v408
    %450 = vmatprep.subr.mxu0 %v411
    %451 = vmatpush1.msra.mxu0 %v410
    %452 = vmatprep.subr.mxu0 %v413
    %453 = vmatpush1.msra.mxu0 %v412
    %454 = vmatprep.subr.mxu0 %v415
    %455 = vmatpush1.msra.mxu0 %v414
    %456 = vmatprep.subr.mxu0 %v417
    %457 = vmatpush1.msra.mxu0 %v416
    %458 = vmatprep.subr.mxu0 0.0
    %459 = vmatpush1.msra.mxu0 0.0
    %460 = vmatprep.subr.mxu0 0.0
    %461 = vmatpush1.msra.mxu0 0.0
    %462 = vmatprep.subr.mxu0 0.0
    %463 = vmatpush1.msra.mxu0 0.0
    %464 = vmatprep.subr.mxu0 0.0
    %465 = vmatpush1.msra.mxu0 0.0
    %466 = vmatprep.subr.mxu0 0.0
    %467 = vmatpush1.msra.mxu0 0.0
    %468 = vmatprep.subr.mxu0 0.0
    %469 = vmatpush1.msra.mxu0 0.0
    %470 = vmatprep.subr.mxu0 0.0
    %471 = vmatpush1.msra.mxu0 0.0
    %472 = vmatprep.subr.mxu0 0.0
    %473 = vmatpush1.msra.mxu0 0.0
    %474 = vmatprep.subr.mxu0 0.0
    %475 = vmatpush1.msra.mxu0 0.0
    %476 = vmatprep.subr.mxu0 0.0
    %477 = vmatpush1.msra.mxu0 0.0
    %478 = vmatprep.subr.mxu0 0.0
    %479 = vmatpush1.msra.mxu0 0.0
    %480 = vmatprep.subr.mxu0 0.0
    %481 = vmatpush1.msra.mxu0 0.0
    %482 = vmatprep.subr.mxu0 0.0
    %483 = vmatpush1.msra.mxu0 0.0
    %484 = vmatprep.subr.mxu0 0.0
    %485 = vmatpush1.msra.mxu0 0.0
    %486 = vmatprep.subr.mxu0 0.0
    %487 = vmatpush1.msra.mxu0 0.0
    %488 = vmatprep.subr.mxu0 0.0
    %489 = vmatpush1.msra.mxu0 0.0
    %490 = vmatprep.mubr.f32.mxu0 0.0
    %491 = vmatmul.mubr.f32.gmra.mrb[0].mxu0 %v382
    %v492 = vpop.f32.mrb[0].mxu0
    %v493 = vadd.f32 %v421, %v492
    %v494 = vpop.f32.mrb[0].mxu0
    %v495 = vadd.f32 %v425, %v494
    %496 = vmatprep.mubr.f32.mxu0 0.0
    %497 = vmatmul.mubr.f32.gmra.mrb[0].mxu0 %v383
    %v498 = vpop.f32.mrb[0].mxu0
    %v499 = vadd.f32 %v421, %v498
    %v500 = vpop.f32.mrb[0].mxu0
    %v501 = vadd.f32 %v425, %v500
    %502 = vmatprep.mubr.f32.mxu0 0.0
    %503 = vmatmul.mubr.f32.gmra.mrb[0].mxu0 %v384
    %v504 = vpop.f32.mrb[0].mxu0
    %v505 = vadd.f32 %v421, %v504
    %v506 = vpop.f32.mrb[0].mxu0
    %v507 = vadd.f32 %v425, %v506
    %508 = vmatprep.mubr.f32.mxu0 0.0
    %509 = vmatmul.mubr.f32.gmra.mrb[0].mxu0 %v385
    %v510 = vpop.f32.mrb[0].mxu0
    %v511 = vadd.f32 %v421, %v510
    %v512 = vpop.f32.mrb[0].mxu0
    %v513 = vadd.f32 %v425, %v512
    %514 = vdwg.mxu0
    %v515 = vmul.f32 %v495, 0.5
    %v516 = vmul.f32 %v501, 0.5
    %v517 = vmul.f32 %v507, 0.5
    %v518 = vmul.f32 %v513, 0.5
    %v519 = vmul.f32 %v515, 1.442695
    %v520 = vpow.pop %v519
    %v521 = vmul.f32 %v516, 1.442695
    %v522 = vpow.pop %v521
    %v523 = vmul.f32 %v517, 1.442695
    %v524 = vpow.pop %v523
    %v525 = vmul.f32 %v518, 1.442695
    %v526 = vpow.pop %v525
    %v527 = vmul.f32 %v162, %v520
    %v528 = vmul.f32 %v163, %v522
    %v529 = vmul.f32 %v164, %v524
    %v530 = vmul.f32 %v165, %v526
    %v531 = vadd.f32 %v493, %v527
    %v532 = vadd.f32 %v499, %v528
    %v533 = vadd.f32 %v505, %v529
    %v534 = vadd.f32 %v511, %v530
    %v535 = vld [vmem:[#allocation11] sm:$0xff]
    %v536 = vld [vmem:[#allocation11 + $0x8] sm:$0xff]
    %v537 = vld [vmem:[#allocation11 + $0x10] sm:$0xff]
    %v538 = vld [vmem:[#allocation11 + $0x18] sm:$0xff]
    %v539 = vld [vmem:[#allocation11 + $0x20] sm:$0xff]
    %v540 = vld [vmem:[#allocation11 + $0x28] sm:$0xff]
    %v541 = vld [vmem:[#allocation11 + $0x30] sm:$0xff]
    %v542 = vld [vmem:[#allocation11 + $0x38] sm:$0xff]
    %v543 = vld [vmem:[#allocation11 + $0x40] sm:$0xff]
    %v544 = vld [vmem:[#allocation11 + $0x48] sm:$0xff]
    %v545 = vld [vmem:[#allocation11 + $0x50] sm:$0xff]
    %v546 = vld [vmem:[#allocation11 + $0x58] sm:$0xff]
    %v547 = vld [vmem:[#allocation11 + $0x60] sm:$0xff]
    %v548 = vld [vmem:[#allocation11 + $0x68] sm:$0xff]
    %v549 = vld [vmem:[#allocation11 + $0x70] sm:$0xff]
    %v550 = vld [vmem:[#allocation11 + $0x78] sm:$0xff]
    %v551 = vld [vmem:[#allocation13] sm:$0xff]
    %v552 = vld [vmem:[#allocation13 + $0x8] sm:$0xff]
    %v553 = vld [vmem:[#allocation13 + $0x10] sm:$0xff]
    %v554 = vld [vmem:[#allocation13 + $0x18] sm:$0xff]
    %v555 = vld [vmem:[#allocation13 + $0x20] sm:$0xff]
    %v556 = vld [vmem:[#allocation13 + $0x28] sm:$0xff]
    %v557 = vld [vmem:[#allocation13 + $0x30] sm:$0xff]
    %v558 = vld [vmem:[#allocation13 + $0x38] sm:$0xff]
    %v559 = vld [vmem:[#allocation13 + $0x40] sm:$0xff]
    %v560 = vld [vmem:[#allocation13 + $0x48] sm:$0xff]
    %v561 = vld [vmem:[#allocation13 + $0x50] sm:$0xff]
    %v562 = vld [vmem:[#allocation13 + $0x58] sm:$0xff]
    %v563 = vld [vmem:[#allocation13 + $0x60] sm:$0xff]
    %v564 = vld [vmem:[#allocation13 + $0x68] sm:$0xff]
    %v565 = vld [vmem:[#allocation13 + $0x70] sm:$0xff]
    %v566 = vld [vmem:[#allocation13 + $0x78] sm:$0xff]
    %567 = vmatprep.subr.mxu0 0.0
    %568 = vmatpush1.msra.mxu0 %v551
    %569 = vmatprep.subr.mxu0 0.0
    %570 = vmatpush1.msra.mxu0 %v552
    %571 = vmatprep.subr.mxu0 0.0
    %572 = vmatpush1.msra.mxu0 %v553
    %573 = vmatprep.subr.mxu0 0.0
    %574 = vmatpush1.msra.mxu0 %v554
    %575 = vmatprep.subr.mxu0 0.0
    %576 = vmatpush1.msra.mxu0 %v555
    %577 = vmatprep.subr.mxu0 0.0
    %578 = vmatpush1.msra.mxu0 %v556
    %579 = vmatprep.subr.mxu0 0.0
    %580 = vmatpush1.msra.mxu0 %v557
    %581 = vmatprep.subr.mxu0 0.0
    %582 = vmatpush1.msra.mxu0 %v558
    %583 = vmatprep.subr.mxu0 0.0
    %584 = vmatpush1.msra.mxu0 %v559
    %585 = vmatprep.subr.mxu0 0.0
    %586 = vmatpush1.msra.mxu0 %v560
    %587 = vmatprep.subr.mxu0 0.0
    %588 = vmatpush1.msra.mxu0 %v561
    %589 = vmatprep.subr.mxu0 0.0
    %590 = vmatpush1.msra.mxu0 %v562
    %591 = vmatprep.subr.mxu0 0.0
    %592 = vmatpush1.msra.mxu0 %v563
    %593 = vmatprep.subr.mxu0 0.0
    %594 = vmatpush1.msra.mxu0 %v564
    %595 = vmatprep.subr.mxu0 0.0
    %596 = vmatpush1.msra.mxu0 %v565
    %597 = vmatprep.subr.mxu0 0.0
    %598 = vmatpush1.msra.mxu0 %v566
    %599 = vmatprep.subr.mxu0 0.0
    %600 = vmatpush1.msra.mxu0 0.0
    %601 = vmatprep.subr.mxu0 0.0
    %602 = vmatpush1.msra.mxu0 0.0
    %603 = vmatprep.subr.mxu0 0.0
    %604 = vmatpush1.msra.mxu0 0.0
    %605 = vmatprep.subr.mxu0 0.0
    %606 = vmatpush1.msra.mxu0 0.0
    %607 = vmatprep.subr.mxu0 0.0
    %608 = vmatpush1.msra.mxu0 0.0
    %609 = vmatprep.subr.mxu0 0.0
    %610 = vmatpush1.msra.mxu0 0.0
    %611 = vmatprep.subr.mxu0 0.0
    %612 = vmatpush1.msra.mxu0 0.0
    %613 = vmatprep.subr.mxu0 0.0
    %614 = vmatpush1.msra.mxu0 0.0
    %615 = vmatprep.subr.mxu0 0.0
    %616 = vmatpush1.msra.mxu0 0.0
    %617 = vmatprep.subr.mxu0 0.0
    %618 = vmatpush1.msra.mxu0 0.0
    %619 = vmatprep.subr.mxu0 0.0
    %620 = vmatpush1.msra.mxu0 0.0
    %621 = vmatprep.subr.mxu0 0.0
    %622 = vmatpush1.msra.mxu0 0.0
    %623 = vmatprep.subr.mxu0 0.0
    %624 = vmatpush1.msra.mxu0 0.0
    %625 = vmatprep.subr.mxu0 0.0
    %626 = vmatpush1.msra.mxu0 0.0
    %627 = vmatprep.subr.mxu0 0.0
    %628 = vmatpush1.msra.mxu0 0.0
    %629 = vmatprep.subr.mxu0 0.0
    %630 = vmatpush1.msra.mxu0 0.0
    %631 = vmatprep.mubr.f32.mxu0 0.0
    %632 = vmatmul.mubr.f32.gmra.mrb[0].mxu0 %v158
    %v633 = vpop.f32.mrb[0].mxu0
    %v634 = vadd.f32 0.0, %v633
    %v635 = vpop.f32.mrb[0].mxu0
    %636 = vmatprep.mubr.f32.mxu0 0.0
    %637 = vmatmul.mubr.f32.gmra.mrb[0].mxu0 %v159
    %v638 = vpop.f32.mrb[0].mxu0
    %v639 = vadd.f32 0.0, %v638
    %v640 = vpop.f32.mrb[0].mxu0
    %641 = vmatprep.mubr.f32.mxu0 0.0
    %642 = vmatmul.mubr.f32.gmra.mrb[0].mxu0 %v160
    %v643 = vpop.f32.mrb[0].mxu0
    %v644 = vadd.f32 0.0, %v643
    %v645 = vpop.f32.mrb[0].mxu0
    %646 = vmatprep.mubr.f32.mxu0 0.0
    %647 = vmatmul.mubr.f32.gmra.mrb[0].mxu0 %v161
    %v648 = vpop.f32.mrb[0].mxu0
    %v649 = vadd.f32 0.0, %v648
    %v650 = vpop.f32.mrb[0].mxu0
    %651 = vdwg.mxu0
    %652 = vmatprep.subr.mxu0 0.0
    %653 = vmatpush1.msra.mxu0 %v535
    %654 = vmatprep.subr.mxu0 0.0
    %655 = vmatpush1.msra.mxu0 %v536
    %656 = vmatprep.subr.mxu0 0.0
    %657 = vmatpush1.msra.mxu0 %v537
    %658 = vmatprep.subr.mxu0 0.0
    %659 = vmatpush1.msra.mxu0 %v538
    %660 = vmatprep.subr.mxu0 0.0
    %661 = vmatpush1.msra.mxu0 %v539
    %662 = vmatprep.subr.mxu0 0.0
    %663 = vmatpush1.msra.mxu0 %v540
    %664 = vmatprep.subr.mxu0 0.0
    %665 = vmatpush1.msra.mxu0 %v541
    %666 = vmatprep.subr.mxu0 0.0
    %667 = vmatpush1.msra.mxu0 %v542
    %668 = vmatprep.subr.mxu0 0.0
    %669 = vmatpush1.msra.mxu0 %v543
    %670 = vmatprep.subr.mxu0 0.0
    %671 = vmatpush1.msra.mxu0 %v544
    %672 = vmatprep.subr.mxu0 0.0
    %673 = vmatpush1.msra.mxu0 %v545
    %674 = vmatprep.subr.mxu0 0.0
    %675 = vmatpush1.msra.mxu0 %v546
    %676 = vmatprep.subr.mxu0 0.0
    %677 = vmatpush1.msra.mxu0 %v547
    %678 = vmatprep.subr.mxu0 0.0
    %679 = vmatpush1.msra.mxu0 %v548
    %680 = vmatprep.subr.mxu0 0.0
    %681 = vmatpush1.msra.mxu0 %v549
    %682 = vmatprep.subr.mxu0 0.0
    %683 = vmatpush1.msra.mxu0 %v550
    %684 = vmatprep.subr.mxu0 0.0
    %685 = vmatpush1.msra.mxu0 0.0
    %686 = vmatprep.subr.mxu0 0.0
    %687 = vmatpush1.msra.mxu0 0.0
    %688 = vmatprep.subr.mxu0 0.0
    %689 = vmatpush1.msra.mxu0 0.0
    %690 = vmatprep.subr.mxu0 0.0
    %691 = vmatpush1.msra.mxu0 0.0
    %692 = vmatprep.subr.mxu0 0.0
    %693 = vmatpush1.msra.mxu0 0.0
    %694 = vmatprep.subr.mxu0 0.0
    %695 = vmatpush1.msra.mxu0 0.0
    %696 = vmatprep.subr.mxu0 0.0
    %697 = vmatpush1.msra.mxu0 0.0
    %698 = vmatprep.subr.mxu0 0.0
    %699 = vmatpush1.msra.mxu0 0.0
    %700 = vmatprep.subr.mxu0 0.0
    %701 = vmatpush1.msra.mxu0 0.0
    %702 = vmatprep.subr.mxu0 0.0
    %703 = vmatpush1.msra.mxu0 0.0
    %704 = vmatprep.subr.mxu0 0.0
    %705 = vmatpush1.msra.mxu0 0.0
    %706 = vmatprep.subr.mxu0 0.0
    %707 = vmatpush1.msra.mxu0 0.0
    %708 = vmatprep.subr.mxu0 0.0
    %709 = vmatpush1.msra.mxu0 0.0
    %710 = vmatprep.subr.mxu0 0.0
    %711 = vmatpush1.msra.mxu0 0.0
    %712 = vmatprep.subr.mxu0 0.0
    %713 = vmatpush1.msra.mxu0 0.0
    %714 = vmatprep.subr.mxu0 0.0
    %715 = vmatpush1.msra.mxu0 0.0
    %716 = vmatprep.mubr.f32.mxu0 0.0
    %717 = vmatmul.mubr.f32.gmra.mrb[0].mxu0 %v531
    %v718 = vpop.f32.mrb[0].mxu0
    %v719 = vadd.f32 %v634, %v718
    %v720 = vpop.f32.mrb[0].mxu0
    %721 = vmatprep.mubr.f32.mxu0 0.0
    %722 = vmatmul.mubr.f32.gmra.mrb[0].mxu0 %v532
    %v723 = vpop.f32.mrb[0].mxu0
    %v724 = vadd.f32 %v639, %v723
    %v725 = vpop.f32.mrb[0].mxu0
    %726 = vmatprep.mubr.f32.mxu0 0.0
    %727 = vmatmul.mubr.f32.gmra.mrb[0].mxu0 %v533
    %v728 = vpop.f32.mrb[0].mxu0
    %v729 = vadd.f32 %v644, %v728
    %v730 = vpop.f32.mrb[0].mxu0
    %731 = vmatprep.mubr.f32.mxu0 0.0
    %732 = vmatmul.mubr.f32.gmra.mrb[0].mxu0 %v534
    %v733 = vpop.f32.mrb[0].mxu0
    %v734 = vadd.f32 %v649, %v733
    %v735 = vpop.f32.mrb[0].mxu0
    %736 = vdwg.mxu0
    %v737 = vlaneseq
    %v738 = vshrl.u32 %v737, 7
    %v739 = vsub.s32 3, %v738
    %v740 = vrot.slane %v166, %v739
    %v741 = vadd.f32 %v719, %v740
    %v742 = vadd.f32 %v724, %v740
    %v743 = vadd.f32 %v729, %v740
    %v744 = vadd.f32 %v734, %v740
    %v745 = vmax.f32 %v741, 0.0
    %v746 = vmax.f32 %v742, 0.0
    %v747 = vmax.f32 %v743, 0.0
    %v748 = vmax.f32 %v744, 0.0
    %v749 = vld [vmem:[#allocation14] sm:$0xff]
    %v750 = vld [vmem:[#allocation14 + $0x8] sm:$0xff]
    %v751 = vld [vmem:[#allocation14 + $0x10] sm:$0xff]
    %v752 = vld [vmem:[#allocation14 + $0x18] sm:$0xff]
    %v753 = vld [vmem:[#allocation14 + $0x20] sm:$0xff]
    %v754 = vld [vmem:[#allocation14 + $0x28] sm:$0xff]
    %v755 = vld [vmem:[#allocation14 + $0x30] sm:$0xff]
    %v756 = vld [vmem:[#allocation14 + $0x38] sm:$0xff]
    %v757 = vld [vmem:[#allocation14 + $0x40] sm:$0xff]
    %v758 = vld [vmem:[#allocation14 + $0x48] sm:$0xff]
    %v759 = vld [vmem:[#allocation14 + $0x50] sm:$0xff]
    %v760 = vld [vmem:[#allocation14 + $0x58] sm:$0xff]
    %v761 = vld [vmem:[#allocation14 + $0x60] sm:$0xff]
    %v762 = vld [vmem:[#allocation14 + $0x68] sm:$0xff]
    %v763 = vld [vmem:[#allocation14 + $0x70] sm:$0xff]
    %v764 = vld [vmem:[#allocation14 + $0x78] sm:$0xff]
    %v765 = vlaneseq
    %v766 = vshrl.u32 %v765, 7
    %v767 = vsub.s32 4, %v766
    %v768 = vrot.slane %v166, %v767
    %769 = vmatprep.subr.mxu0 0.0
    %770 = vmatpush1.msra.mxu0 %v749
    %771 = vmatprep.subr.mxu0 0.0
    %772 = vmatpush1.msra.mxu0 %v750
    %773 = vmatprep.subr.mxu0 0.0
    %774 = vmatpush1.msra.mxu0 %v751
    %775 = vmatprep.subr.mxu0 0.0
    %776 = vmatpush1.msra.mxu0 %v752
    %777 = vmatprep.subr.mxu0 0.0
    %778 = vmatpush1.msra.mxu0 %v753
    %779 = vmatprep.subr.mxu0 0.0
    %780 = vmatpush1.msra.mxu0 %v754
    %781 = vmatprep.subr.mxu0 0.0
    %782 = vmatpush1.msra.mxu0 %v755
    %783 = vmatprep.subr.mxu0 0.0
    %784 = vmatpush1.msra.mxu0 %v756
    %785 = vmatprep.subr.mxu0 0.0
    %786 = vmatpush1.msra.mxu0 %v757
    %787 = vmatprep.subr.mxu0 0.0
    %788 = vmatpush1.msra.mxu0 %v758
    %789 = vmatprep.subr.mxu0 0.0
    %790 = vmatpush1.msra.mxu0 %v759
    %791 = vmatprep.subr.mxu0 0.0
    %792 = vmatpush1.msra.mxu0 %v760
    %793 = vmatprep.subr.mxu0 0.0
    %794 = vmatpush1.msra.mxu0 %v761
    %795 = vmatprep.subr.mxu0 0.0
    %796 = vmatpush1.msra.mxu0 %v762
    %797 = vmatprep.subr.mxu0 0.0
    %798 = vmatpush1.msra.mxu0 %v763
    %799 = vmatprep.subr.mxu0 0.0
    %800 = vmatpush1.msra.mxu0 %v764
    %801 = vmatprep.subr.mxu0 0.0
    %802 = vmatpush1.msra.mxu0 0.0
    %803 = vmatprep.subr.mxu0 0.0
    %804 = vmatpush1.msra.mxu0 0.0
    %805 = vmatprep.subr.mxu0 0.0
    %806 = vmatpush1.msra.mxu0 0.0
    %807 = vmatprep.subr.mxu0 0.0
    %808 = vmatpush1.msra.mxu0 0.0
    %809 = vmatprep.subr.mxu0 0.0
    %810 = vmatpush1.msra.mxu0 0.0
    %811 = vmatprep.subr.mxu0 0.0
    %812 = vmatpush1.msra.mxu0 0.0
    %813 = vmatprep.subr.mxu0 0.0
    %814 = vmatpush1.msra.mxu0 0.0
    %815 = vmatprep.subr.mxu0 0.0
    %816 = vmatpush1.msra.mxu0 0.0
    %817 = vmatprep.subr.mxu0 0.0
    %818 = vmatpush1.msra.mxu0 0.0
    %819 = vmatprep.subr.mxu0 0.0
    %820 = vmatpush1.msra.mxu0 0.0
    %821 = vmatprep.subr.mxu0 0.0
    %822 = vmatpush1.msra.mxu0 0.0
    %823 = vmatprep.subr.mxu0 0.0
    %824 = vmatpush1.msra.mxu0 0.0
    %825 = vmatprep.subr.mxu0 0.0
    %826 = vmatpush1.msra.mxu0 0.0
    %827 = vmatprep.subr.mxu0 0.0
    %828 = vmatpush1.msra.mxu0 0.0
    %829 = vmatprep.subr.mxu0 0.0
    %830 = vmatpush1.msra.mxu0 0.0
    %831 = vmatprep.subr.mxu0 0.0
    %832 = vmatpush1.msra.mxu0 0.0
    %833 = vmatprep.mubr.f32.mxu0 0.0
    %834 = vmatmul.mubr.f32.gmra.mrb[0].mxu0 %v745
    %v835 = vpop.f32.mrb[0].mxu0
    %v836 = vadd.f32 %v768, %v835
    %v837 = vpop.f32.mrb[0].mxu0
    %838 = vmatprep.mubr.f32.mxu0 0.0
    %839 = vmatmul.mubr.f32.gmra.mrb[0].mxu0 %v746
    %v840 = vpop.f32.mrb[0].mxu0
    %v841 = vadd.f32 %v768, %v840
    %v842 = vpop.f32.mrb[0].mxu0
    %843 = vmatprep.mubr.f32.mxu0 0.0
    %844 = vmatmul.mubr.f32.gmra.mrb[0].mxu0 %v747
    %v845 = vpop.f32.mrb[0].mxu0
    %v846 = vadd.f32 %v768, %v845
    %v847 = vpop.f32.mrb[0].mxu0
    %848 = vmatprep.mubr.f32.mxu0 0.0
    %849 = vmatmul.mubr.f32.gmra.mrb[0].mxu0 %v748
    %v850 = vpop.f32.mrb[0].mxu0
    %v851 = vadd.f32 %v768, %v850
    %v852 = vpop.f32.mrb[0].mxu0
    %853 = vdwg.mxu0
    %v854 = vmax.f32 %v836, 0.0
    %v855 = vmax.f32 %v841, 0.0
    %v856 = vmax.f32 %v846, 0.0
    %v857 = vmax.f32 %v851, 0.0
    %v858 = vld [vmem:[#allocation16] sm:$0xff]
    %v859 = vld [vmem:[#allocation16 + $0x8] sm:$0xff]
    %v860 = vld [vmem:[#allocation16 + $0x10] sm:$0xff]
    %v861 = vld [vmem:[#allocation16 + $0x18] sm:$0xff]
    %v862 = vld [vmem:[#allocation16 + $0x20] sm:$0xff]
    %v863 = vld [vmem:[#allocation16 + $0x28] sm:$0xff]
    %v864 = vld [vmem:[#allocation16 + $0x30] sm:$0xff]
    %v865 = vld [vmem:[#allocation16 + $0x38] sm:$0xff]
    %v866 = vld [vmem:[#allocation16 + $0x40] sm:$0xff]
    %v867 = vld [vmem:[#allocation16 + $0x48] sm:$0xff]
    %v868 = vld [vmem:[#allocation16 + $0x50] sm:$0xff]
    %v869 = vld [vmem:[#allocation16 + $0x58] sm:$0xff]
    %v870 = vld [vmem:[#allocation16 + $0x60] sm:$0xff]
    %v871 = vld [vmem:[#allocation16 + $0x68] sm:$0xff]
    %v872 = vld [vmem:[#allocation16 + $0x70] sm:$0xff]
    %v873 = vld [vmem:[#allocation16 + $0x78] sm:$0xff]
    %v874 = vlaneseq
    %v875 = vshrl.u32 %v874, 7
    %v876 = vsub.s32 5, %v875
    %v877 = vrot.slane %v166, %v876
    %878 = vmatprep.subr.mxu0 0.0
    %879 = vmatpush1.msra.mxu0 %v858
    %880 = vmatprep.subr.mxu0 0.0
    %881 = vmatpush1.msra.mxu0 %v859
    %882 = vmatprep.subr.mxu0 0.0
    %883 = vmatpush1.msra.mxu0 %v860
    %884 = vmatprep.subr.mxu0 0.0
    %885 = vmatpush1.msra.mxu0 %v861
    %886 = vmatprep.subr.mxu0 0.0
    %887 = vmatpush1.msra.mxu0 %v862
    %888 = vmatprep.subr.mxu0 0.0
    %889 = vmatpush1.msra.mxu0 %v863
    %890 = vmatprep.subr.mxu0 0.0
    %891 = vmatpush1.msra.mxu0 %v864
    %892 = vmatprep.subr.mxu0 0.0
    %893 = vmatpush1.msra.mxu0 %v865
    %894 = vmatprep.subr.mxu0 0.0
    %895 = vmatpush1.msra.mxu0 %v866
    %896 = vmatprep.subr.mxu0 0.0
    %897 = vmatpush1.msra.mxu0 %v867
    %898 = vmatprep.subr.mxu0 0.0
    %899 = vmatpush1.msra.mxu0 %v868
    %900 = vmatprep.subr.mxu0 0.0
    %901 = vmatpush1.msra.mxu0 %v869
    %902 = vmatprep.subr.mxu0 0.0
    %903 = vmatpush1.msra.mxu0 %v870
    %904 = vmatprep.subr.mxu0 0.0
    %905 = vmatpush1.msra.mxu0 %v871
    %906 = vmatprep.subr.mxu0 0.0
    %907 = vmatpush1.msra.mxu0 %v872
    %908 = vmatprep.subr.mxu0 0.0
    %909 = vmatpush1.msra.mxu0 %v873
    %910 = vmatprep.subr.mxu0 0.0
    %911 = vmatpush1.msra.mxu0 0.0
    %912 = vmatprep.subr.mxu0 0.0
    %913 = vmatpush1.msra.mxu0 0.0
    %914 = vmatprep.subr.mxu0 0.0
    %915 = vmatpush1.msra.mxu0 0.0
    %916 = vmatprep.subr.mxu0 0.0
    %917 = vmatpush1.msra.mxu0 0.0
    %918 = vmatprep.subr.mxu0 0.0
    %919 = vmatpush1.msra.mxu0 0.0
    %920 = vmatprep.subr.mxu0 0.0
    %921 = vmatpush1.msra.mxu0 0.0
    %922 = vmatprep.subr.mxu0 0.0
    %923 = vmatpush1.msra.mxu0 0.0
    %924 = vmatprep.subr.mxu0 0.0
    %925 = vmatpush1.msra.mxu0 0.0
    %926 = vmatprep.subr.mxu0 0.0
    %927 = vmatpush1.msra.mxu0 0.0
    %928 = vmatprep.subr.mxu0 0.0
    %929 = vmatpush1.msra.mxu0 0.0
    %930 = vmatprep.subr.mxu0 0.0
    %931 = vmatpush1.msra.mxu0 0.0
    %932 = vmatprep.subr.mxu0 0.0
    %933 = vmatpush1.msra.mxu0 0.0
    %934 = vmatprep.subr.mxu0 0.0
    %935 = vmatpush1.msra.mxu0 0.0
    %936 = vmatprep.subr.mxu0 0.0
    %937 = vmatpush1.msra.mxu0 0.0
    %938 = vmatprep.subr.mxu0 0.0
    %939 = vmatpush1.msra.mxu0 0.0
    %940 = vmatprep.subr.mxu0 0.0
    %941 = vmatpush1.msra.mxu0 0.0
    %942 = vmatprep.mubr.f32.mxu0 0.0
    %943 = vmatmul.mubr.f32.gmra.mrb[0].mxu0 %v854
    %v944 = vpop.f32.mrb[0].mxu0
    %v945 = vadd.f32 %v877, %v944
    %v946 = vpop.f32.mrb[0].mxu0
    %947 = vmatprep.mubr.f32.mxu0 0.0
    %948 = vmatmul.mubr.f32.gmra.mrb[0].mxu0 %v855
    %v949 = vpop.f32.mrb[0].mxu0
    %v950 = vadd.f32 %v877, %v949
    %v951 = vpop.f32.mrb[0].mxu0
    %952 = vmatprep.mubr.f32.mxu0 0.0
    %953 = vmatmul.mubr.f32.gmra.mrb[0].mxu0 %v856
    %v954 = vpop.f32.mrb[0].mxu0
    %v955 = vadd.f32 %v877, %v954
    %v956 = vpop.f32.mrb[0].mxu0
    %957 = vmatprep.mubr.f32.mxu0 0.0
    %958 = vmatmul.mubr.f32.gmra.mrb[0].mxu0 %v857
    %v959 = vpop.f32.mrb[0].mxu0
    %v960 = vadd.f32 %v877, %v959
    %v961 = vpop.f32.mrb[0].mxu0
    %962 = vdwg.mxu0
    %963 = vst [vmem:[#allocation17] sm:$0xff] %v493
    %964 = vst [vmem:[#allocation17 + $0x8] sm:$0xff] %v495
    %965 = vst [vmem:[#allocation17 + $0x10] sm:$0xff] %v531
    %966 = vst [vmem:[#allocation17 + $0x18] sm:$0xff] %v945
    %967 = vst [vmem:[#allocation17 + $0x20] sm:$0xff] %v499
    %968 = vst [vmem:[#allocation17 + $0x28] sm:$0xff] %v501
    %969 = vst [vmem:[#allocation17 + $0x30] sm:$0xff] %v532
    %970 = vst [vmem:[#allocation17 + $0x38] sm:$0xff] %v950
    %971 = vst [vmem:[#allocation17 + $0x40] sm:$0xff] %v505
    %972 = vst [vmem:[#allocation17 + $0x48] sm:$0xff] %v507
    %973 = vst [vmem:[#allocation17 + $0x50] sm:$0xff] %v533
    %974 = vst [vmem:[#allocation17 + $0x58] sm:$0xff] %v955
    %975 = vst [vmem:[#allocation17 + $0x60] sm:$0xff] %v511
    %976 = vst [vmem:[#allocation17 + $0x68] sm:$0xff] %v513
    %977 = vst [vmem:[#allocation17 + $0x70] sm:$0xff] %v534
    %978 = vst [vmem:[#allocation17 + $0x78] sm:$0xff] %v960
    // Predicated region
    $region78: #{tpu_custom_call.1} parent=1 // pred_check
      _
    $region79: #{tpu_custom_call.1} parent=1 // pred_check_branch
      %980 = sbr.rel (0) target = $region81
    $region80: #{tpu_custom_call.1} parent=1 // pred_region
      %s982 = ssub.s32 2048, 2048
      %983 = vsyncadd [#allocation4], %s982
      %s984 = sshll.u32 [#allocation17], 4
      %s985 = int_to_ptr.vmem [resolvable:$true] %s984
      %990 = dma.vmem_to_hbm [thread:$0]  %s985, 2048, %s10, [#allocation4], 512, 512, 32
    $region81: #{tpu_custom_call.1} parent=1 // pred_fallthru
      _
    // Predicated region
    $region82: #{tpu_custom_call.1} parent=1 // pred_check
      _
    $region83: #{tpu_custom_call.1} parent=1 // pred_check_branch
      %992 = sbr.rel (0) target = $region85
    $region84: #{tpu_custom_call.1} parent=1 // pred_region
      %993 = dma.done [#allocation4], 2048
    $region85: #{tpu_custom_call.1} parent=1 // pred_fallthru
      _
    %994 = vsyncpa [#allocation3], 1
    %995 = vsyncpa [#allocation6], 1
    %996 = vsyncpa [#allocation9], 1
    %997 = vsyncpa [#allocation12], 1
    %998 = vsyncpa [#allocation15], 1
    %999 = vsyncpa [#allocation4], 1

</llo_original>
